<compile_context>
chip_gen: v7x
topology: tpu7x:2x2x1
jax: 0.10.0
libtpu: 0.0.40
codegen_flags: <defaults>
</compile_context>

<pallas_src>
import functools
import math

import jax
import jax.numpy as jnp
from jax.experimental import pallas as pl
from jax.experimental.pallas import tpu as pltpu


# ----------------------------------------------------------------------------- chip-adaptive budgets

def _pick_vmem_limit():
    """32 MiB scoped budget on 64 MiB-VMEM parts (v7x), 64 MiB on 128 MiB parts (v5e/v6e)."""
    try:
        cap = int(pltpu.get_tpu_info().vmem_capacity_bytes)
    except Exception:
        return 32 * 1024 * 1024
    return min(max(cap // 2, 32 * 1024 * 1024), 96 * 1024 * 1024)


_VMEM_LIMIT = _pick_vmem_limit()
_BIG_VMEM = _VMEM_LIMIT >= 48 * 1024 * 1024
_TM_DEF, _TN_DEF, _TK_DEF = (256, 1024, 1024) if _BIG_VMEM else (256, 512, 512)
_ROW_BUDGET = (10 << 20) if _BIG_VMEM else (6 << 20)


# ----------------------------------------------------------------------------- tiling helpers

def _round_up(x, m):
    return (x + m - 1) // m * m


def _choose_tile(dim, max_tile, align):
    """Pick (tile, padded_dim). A full-dim block is always legal; otherwise the tile
    must be a multiple of `align` (sublane/lane rules)."""
    if dim <= max_tile:
        return dim, dim
    top = max_tile - max_tile % align
    for t in range(top, align - 1, -align):
        if dim % t == 0:
            return t, dim
    return top, _round_up(dim, top)


def _choose_row_tile(m, ncols, max_rows=512, budget_bytes=_ROW_BUDGET):
    """Row tile for row-wise kernels, capped so the (rows, ncols) f32 block fits the
    per-chip VMEM budget (important for vocab-sized last dims, tighter on v7x)."""
    cap = max(8, (budget_bytes // max(4 * ncols, 1)) // 8 * 8)
    return _choose_tile(m, min(max_rows, cap), 8)


# ----------------------------------------------------------------------------- linear (tiled matmul, fused epilogues)

def _gelu_tanh(y):
    # TODO(synk): HF BERT uses exact erf-GELU; tanh approximation used for robust Mosaic lowering.
    c = math.sqrt(2.0 / math.pi)
    return 0.5 * y * (1.0 + jnp.tanh(c * (y + 0.044715 * y * y * y)))


def _epilogue(acc, bias, activation, residual, gamma, beta, eps):
    y = acc + bias
    if activation == "gelu":
        y = _gelu_tanh(y)
    if residual is not None:
        y = y + residual
    if gamma is not None:
        mean = jnp.mean(y, axis=-1, keepdims=True)
        var = jnp.mean((y - mean) ** 2, axis=-1, keepdims=True)
        y = (y - mean) * jax.lax.rsqrt(var + eps) * gamma + beta
    return y


def _mxu_step(x_ref, w_ref, acc_ref):
    @pl.when(pl.program_id(2) == 0)
    def _():
        acc_ref[...] = jnp.zeros_like(acc_ref)
    acc_ref[...] += jnp.dot(x_ref[...].astype(jnp.bfloat16),
                            w_ref[...].astype(jnp.bfloat16),
                            preferred_element_type=jnp.float32)


def _linear_kernel(x_ref, w_ref, b_ref, o_ref, acc_ref, *, activation):
    _mxu_step(x_ref, w_ref, acc_ref)

    @pl.when(pl.program_id(2) == pl.num_programs(2) - 1)
    def _():
        o_ref[...] = _epilogue(acc_ref[...], b_ref[...], activation,
                               None, None, None, 0.0).astype(o_ref.dtype)


def _linear_ln_kernel(x_ref, w_ref, b_ref, g_ref, bb_ref, o_ref, acc_ref, *, activation, eps):
    _mxu_step(x_ref, w_ref, acc_ref)

    @pl.when(pl.program_id(2) == pl.num_programs(2) - 1)
    def _():
        o_ref[...] = _epilogue(acc_ref[...], b_ref[...], activation,
                               None, g_ref[...], bb_ref[...], eps).astype(o_ref.dtype)


def _linear_add_ln_kernel(x_ref, w_ref, b_ref, r_ref, g_ref, bb_ref, o_ref, acc_ref, *, activation, eps):
    _mxu_step(x_ref, w_ref, acc_ref)

    @pl.when(pl.program_id(2) == pl.num_programs(2) - 1)
    def _():
        res = r_ref[...].astype(jnp.float32)          # residual add fused (no extra HBM pass)
        o_ref[...] = _epilogue(acc_ref[...], b_ref[...], activation,
                               res, g_ref[...], bb_ref[...], eps).astype(o_ref.dtype)


def pallas_linear(x, w, b, activation=None, residual=None, ln=None, eps=1e-12,
                  out_dtype=jnp.bfloat16, tm_max=None, tn_max=None, tk_max=None):
    """y = act(x @ w + b) [+ residual] [-> LayerNorm].  x activations bf16/f32, weights bf16,
    f32 VMEM accumulator, bf16 (or f32) output."""
    tm_max = tm_max or _TM_DEF
    tn_max = tn_max or _TN_DEF
    tk_max = tk_max or _TK_DEF
    M, K = x.shape
    Kw, N = w.shape
    assert K == Kw
    fuse_ln = ln is not None
    fuse_res = residual is not None
    if fuse_ln:
        tn_max = max(tn_max, N)          # LayerNorm epilogue needs the full row in one N tile

    tm, m_pad = _choose_tile(M, tm_max, 16)
    tn, n_pad = _choose_tile(N, tn_max, 128)
    tk, k_pad = _choose_tile(K, tk_max, 128)

    if (m_pad, k_pad) != (M, K):
        x = jnp.pad(x, ((0, m_pad - M), (0, k_pad - K)))
    if (k_pad, n_pad) != (K, N):
        # Cold fallback only: model weights are pre-shaped/padded at init.
        w = jnp.pad(w, ((0, k_pad - K), (0, n_pad - N)))
    b2 = b.reshape(1, N).astype(jnp.float32)
    if n_pad != N:
        b2 = jnp.pad(b2, ((0, 0), (0, n_pad - N)))

    inputs = [x, w, b2]
    in_specs = [pl.BlockSpec((tm, tk), lambda i, j, k: (i, k)),
                pl.BlockSpec((tk, tn), lambda i, j, k: (k, j)),
                pl.BlockSpec((1, tn), lambda i, j, k: (0, j))]

    if fuse_res:
        r = residual
        if (m_pad, n_pad) != (M, N):
            r = jnp.pad(r, ((0, m_pad - M), (0, n_pad - N)))
        inputs.append(r)
        in_specs.append(pl.BlockSpec((tm, tn), lambda i, j, k: (i, j)))
    if fuse_ln:
        g, bb = ln
        inputs += [g.reshape(1, N).astype(jnp.float32), bb.reshape(1, N).astype(jnp.float32)]
        in_specs += [pl.BlockSpec((1, tn), lambda i, j, k: (0, j)),
                     pl.BlockSpec((1, tn), lambda i, j, k: (0, j))]

    if fuse_res and fuse_ln:
        kernel = functools.partial(_linear_add_ln_kernel, activation=activation, eps=eps)
    elif fuse_ln:
        kernel = functools.partial(_linear_ln_kernel, activation=activation, eps=eps)
    else:
        kernel = functools.partial(_linear_kernel, activation=activation)

    out = pl.pallas_call(
        kernel,
        out_shape=jax.ShapeDtypeStruct((m_pad, n_pad), out_dtype),
        grid=(m_pad // tm, n_pad // tn, k_pad // tk),
        in_specs=in_specs,
        out_specs=pl.BlockSpec((tm, tn), lambda i, j, k: (i, j)),
        scratch_shapes=[pltpu.VMEM((tm, tn), jnp.float32)],
        compiler_params=pltpu.CompilerParams(
            dimension_semantics=("parallel", "parallel", "arbitrary"),
            vmem_limit_bytes=_VMEM_LIMIT),
    )(*inputs)
    if (m_pad, n_pad) != (M, N):
        out = out[:M, :N]
    return out


# ----------------------------------------------------------------------------- standalone layernorm (embeddings)

def _layernorm_kernel(x_ref, g_ref, b_ref, o_ref, *, eps):
    x = x_ref[...].astype(jnp.float32)
    mean = jnp.mean(x, axis=-1, keepdims=True)
    var = jnp.mean((x - mean) ** 2, axis=-1, keepdims=True)
    o_ref[...] = ((x - mean) * jax.lax.rsqrt(var + eps) * g_ref[...] + b_ref[...]).astype(o_ref.dtype)


def pallas_layernorm(x, gamma, beta, eps=1e-12, out_dtype=jnp.bfloat16):
    M, H = x.shape
    rt, m_pad = _choose_row_tile(M, H)
    if m_pad != M:
        x = jnp.pad(x, ((0, m_pad - M), (0, 0)))
    out = pl.pallas_call(
        functools.partial(_layernorm_kernel, eps=eps),
        out_shape=jax.ShapeDtypeStruct((m_pad, H), out_dtype),
        grid=(m_pad // rt,),
        in_specs=[pl.BlockSpec((rt, H), lambda i: (i, 0)),
                  pl.BlockSpec((1, H), lambda i: (0, 0)),
                  pl.BlockSpec((1, H), lambda i: (0, 0))],
        out_specs=pl.BlockSpec((rt, H), lambda i: (i, 0)),
        compiler_params=pltpu.CompilerParams(
            dimension_semantics=("parallel",), vmem_limit_bytes=_VMEM_LIMIT),
    )(x, gamma.reshape(1, H).astype(jnp.float32), beta.reshape(1, H).astype(jnp.float32))
    return out[:M] if m_pad != M else out


# ----------------------------------------------------------------------------- attention (per-(batch, head) grid)

def _attention_kernel(q_ref, k_ref, v_ref, m_ref, o_ref, *, scale):
    q = q_ref[0, 0] * scale                                  # (S, Dh) bf16, scale folded into Q
    k = k_ref[0, 0]
    v = v_ref[0, 0]
    s = jax.lax.dot_general(q, k, (((1,), (1,)), ((), ())),
                            preferred_element_type=jnp.float32)        # (S, S) f32
    s = s + m_ref[0]                                         # additive mask (1, S), broadcasts over rows
    s = s - jnp.max(s, axis=-1, keepdims=True)
    p = jnp.exp(s)
    p = p * pl.reciprocal(jnp.sum(p, axis=-1, keepdims=True), approx=True)   # EUP slot, internal only
    o_ref[0, 0] = jnp.dot(p.astype(jnp.bfloat16), v,
                          preferred_element_type=jnp.float32).astype(o_ref.dtype)


def pallas_attention(qkv, add_mask, num_heads, head_dim, hidden, scale):
    """qkv: (B, S, 3H) bf16 packed Q|K|V.  Returns (B*S, hidden) bf16 context."""
    B, S, _ = qkv.shape
    nh, Dh = num_heads, head_dim
    # Head-major layout so every per-head block is dense in its trailing dims (wrapper-side
    # layout plumbing; the kernel loads/stores full (S, Dh) slabs with no masked accesses).
    qkv_h = jnp.transpose(qkv.reshape(B, S, 3, nh, Dh), (2, 0, 3, 1, 4))   # (3, B, nh, S, Dh)
    q, k, v = qkv_h[0], qkv_h[1], qkv_h[2]

    ctx = pl.pallas_call(
        functools.partial(_attention_kernel, scale=scale),
        out_shape=jax.ShapeDtypeStruct((B, nh, S, Dh), jnp.bfloat16),
        grid=(B, nh),
        in_specs=[
            pl.BlockSpec((1, 1, S, Dh), lambda b, h: (b, h, 0, 0)),
            pl.BlockSpec((1, 1, S, Dh), lambda b, h: (b, h, 0, 0)),
            pl.BlockSpec((1, 1, S, Dh), lambda b, h: (b, h, 0, 0)),
            pl.BlockSpec((1, 1, S), lambda b, h: (b, 0, 0)),
        ],
        out_specs=pl.BlockSpec((1, 1, S, Dh), lambda b, h: (b, h, 0, 0)),
        compiler_params=pltpu.CompilerParams(
            dimension_semantics=("parallel", "parallel"),      # B*nh parallel slices (megacore)
            vmem_limit_bytes=_VMEM_LIMIT),
    )(q, k, v, add_mask)
    return jnp.transpose(ctx, (0, 2, 1, 3)).reshape(B * S, hidden)


# ----------------------------------------------------------------------------- softmax / fused cross-entropy

def _softmax_kernel(x_ref, o_ref):
    x = x_ref[...].astype(jnp.float32)
    m = jnp.max(x, axis=-1, keepdims=True)
    e = jnp.exp(x - m)
    # Exact divide: returned probabilities must sum to 1 (approx reciprocal kept out of here).
    o_ref[...] = e / jnp.sum(e, axis=-1, keepdims=True)


def pallas_softmax(x):
    M, V = x.shape
    rt, m_pad = _choose_row_tile(M, V)
    if m_pad != M:
        x = jnp.pad(x, ((0, m_pad - M), (0, 0)))
    out = pl.pallas_call(
        _softmax_kernel,
        out_shape=jax.ShapeDtypeStruct((m_pad, V), jnp.float32),
        grid=(m_pad // rt,),
        in_specs=[pl.BlockSpec((rt, V), lambda i: (i, 0))],
        out_specs=pl.BlockSpec((rt, V), lambda i: (i, 0)),
        compiler_params=pltpu.CompilerParams(
            dimension_semantics=("parallel",), vmem_limit_bytes=_VMEM_LIMIT),
    )(x)
    return out[:M] if m_pad != M else out


def _ce_kernel(x_ref, lab_ref, o_ref):
    x = x_ref[...].astype(jnp.float32)                  # (rt, V) logits
    lab = lab_ref[...]                                  # (rt, 1) int32 labels
    m = jnp.max(x, axis=-1, keepdims=True)
    lse = m + jnp.log(jnp.sum(jnp.exp(x - m), axis=-1, keepdims=True))
    cols = jax.lax.broadcasted_iota(jnp.int32, x.shape, 1)
    picked = jnp.sum(jnp.where(cols == lab, x, 0.0), axis=-1, keepdims=True)
    o_ref[...] = lse - picked                           # per-row NLL (ignored rows masked outside)


def pallas_cross_entropy_nll(logits, labels_flat):
    M, V = logits.shape
    rt, m_pad = _choose_row_tile(M, V)
    lab = labels_flat.reshape(M, 1).astype(jnp.int32)
    if m_pad != M:
        logits = jnp.pad(logits, ((0, m_pad - M), (0, 0)))
        lab = jnp.pad(lab, ((0, m_pad - M), (0, 0)), constant_values=-100)
    nll = pl.pallas_call(
        _ce_kernel,
        out_shape=jax.ShapeDtypeStruct((m_pad, 1), jnp.float32),
        grid=(m_pad // rt,),
        in_specs=[pl.BlockSpec((rt, V), lambda i: (i, 0)),
                  pl.BlockSpec((rt, 1), lambda i: (i, 0))],
        out_specs=pl.BlockSpec((rt, 1), lambda i: (i, 0)),
        compiler_params=pltpu.CompilerParams(
            dimension_semantics=("parallel",), vmem_limit_bytes=_VMEM_LIMIT),
    )(logits, lab)
    return nll[:M, 0]


# ----------------------------------------------------------------------------- model (glue + kernels)

def init_params(key, cfg):
    V, H, I, P, L = cfg["vocab"], cfg["hidden"], cfg["intermediate"], cfg["max_pos"], cfg["layers"]
    keys = iter(jax.random.split(key, 16 + 8 * L))

    def w(shape):
        return (0.02 * jax.random.normal(next(keys), shape)).astype(jnp.float32)

    bf = lambda t: t.astype(jnp.bfloat16)    # matmul weights stored once in bf16 (MXU dtype)
    zeros = lambda s: jnp.zeros(s, jnp.float32)
    ones = lambda s: jnp.ones(s, jnp.float32)

    word = w((V, H))

    # Tied decoder weight: pre-transposed AND pre-padded once at init (never padded per call).
    # Padded vocab columns get a -1e9 bias so they are inert in softmax / cross-entropy.
    V_pad = _round_up(V, 512) if V > 512 else V
    dec_w = word.T
    dec_b = zeros((V,))
    if V_pad != V:
        dec_w = jnp.pad(dec_w, ((0, 0), (0, V_pad - V)))
        dec_b = jnp.pad(dec_b, ((0, V_pad - V),), constant_values=-1e9)

    params = dict(
        word_embeddings=word,
        position_embeddings=w((P, H)),
        token_type_embeddings=w((2, H)),
        emb_ln_g=ones((H,)), emb_ln_b=zeros((H,)),
        layers=[],
        mlm_dense_w=bf(w((H, H))), mlm_dense_b=zeros((H,)),
        mlm_ln_g=ones((H,)), mlm_ln_b=zeros((H,)),
        decoder_w=bf(dec_w),
        decoder_b=dec_b,
    )
    for _ in range(L):
        params["layers"].append(dict(
            # fused Q|K|V projection: one (H, 3H) matmul instead of three
            qkv_w=bf(jnp.concatenate([w((H, H)), w((H, H)), w((H, H))], axis=1)),
            qkv_b=zeros((3 * H,)),
            ao_w=bf(w((H, H))), ao_b=zeros((H,)),
            attn_ln_g=ones((H,)), attn_ln_b=zeros((H,)),
            i_w=bf(w((H, I))), i_b=zeros((I,)),
            o_w=bf(w((I, H))), o_b=zeros((H,)),
            out_ln_g=ones((H,)), out_ln_b=zeros((H,)),
        ))
    return params


def encoder_layer(x2, add_mask, p, num_heads, B, S, H):
    """x2: (B*S, H) bf16 activations."""
    Dh = H // num_heads

    qkv = pallas_linear(x2, p["qkv_w"], p["qkv_b"])                        # (B*S, 3H) bf16
    ctx = pallas_attention(qkv.reshape(B, S, 3 * H), add_mask,
                           num_heads=num_heads, head_dim=Dh, hidden=H,
                           scale=1.0 / math.sqrt(Dh))                      # (B*S, H) bf16

    # attention output projection + residual + LayerNorm fused in one kernel
    x2 = pallas_linear(ctx, p["ao_w"], p["ao_b"], residual=x2,
                       ln=(p["attn_ln_g"], p["attn_ln_b"]))

    inter = pallas_linear(x2, p["i_w"], p["i_b"], activation="gelu")       # (B*S, I) bf16
    # FFN output projection + residual + LayerNorm fused in one kernel
    x2 = pallas_linear(inter, p["o_w"], p["o_b"], residual=x2,
                       ln=(p["out_ln_g"], p["out_ln_b"]))
    return x2


def bert_mlm_forward(params, cfg, input_ids, attention_mask=None, labels=None):
    B, S = input_ids.shape
    H, V, nh = cfg["hidden"], cfg["vocab"], cfg["heads"]

    # ---- embeddings (gathers stay in plain JAX glue)
    word = params["word_embeddings"][input_ids]                     # (B, S, H)
    pos = params["position_embeddings"][:S]                         # (S, H)
    tok = params["token_type_embeddings"][0]                        # (H,)  token_type_ids == 0
    emb = word + pos[None, :, :] + tok[None, None, :]
    x2 = pallas_layernorm(emb.reshape(B * S, H),
                          params["emb_ln_g"], params["emb_ln_b"])   # (B*S, H) bf16
    # (dropout is identity in eval mode)

    if attention_mask is None:
        attention_mask = jnp.ones((B, S), jnp.float32)
    add_mask = ((1.0 - attention_mask.astype(jnp.float32)) * -10000.0).reshape(B, 1, S)

    # ---- encoder
    for layer_params in params["layers"]:
        x2 = encoder_layer(x2, add_mask, layer_params, nh, B, S, H)

    # ---- MLM head: dense + gelu + layernorm (fused) + tied decoder
    h = pallas_linear(x2, params["mlm_dense_w"], params["mlm_dense_b"],
                      activation="gelu", ln=(params["mlm_ln_g"], params["mlm_ln_b"]))
    logits = pallas_linear(h, params["decoder_w"], params["decoder_b"],
                           out_dtype=jnp.float32, tm_max=512)       # (B*S, V_pad) f32
    V_pad = logits.shape[1]

    if labels is None:
        # torch.softmax(outputs[0], dim=-1)
        probs = pallas_softmax(logits).reshape(B, S, V_pad)
        return probs[:, :, :V] if V_pad != V else probs

    # CrossEntropyLoss(ignore_index=-100), mean over non-ignored positions (fused CE kernel).
    labels_flat = labels.reshape(-1)
    nll = pallas_cross_entropy_nll(logits, labels_flat)
    valid = labels_flat != -100
    denom = jnp.maximum(jnp.sum(valid), 1).astype(jnp.float32)
    loss = jnp.sum(jnp.where(valid, nll, 0.0)) / denom
    return loss


# ----------------------------------------------------------------------------- demo

if __name__ == "__main__":
    cfg = dict(vocab=128, hidden=32, heads=2, layers=2, intermediate=64, max_pos=16)

    key = jax.random.PRNGKey(0)
    k_param, k_ids, _ = jax.random.split(key, 3)

    params = init_params(k_param, cfg)

    B, S = 2, 8
    input_ids = jax.random.randint(k_ids, (B, S), 0, cfg["vocab"], dtype=jnp.int32)
    attention_mask = jnp.ones((B, S), jnp.float32)

    # labels=None branch: softmax over vocab
    probs = bert_mlm_forward(params, cfg, input_ids, attention_mask, labels=None)
    probs = jax.block_until_ready(probs)
    assert probs.shape == (B, S, cfg["vocab"])
    assert jnp.allclose(jnp.sum(probs, axis=-1), 1.0, atol=1e-3)   # exact divide -> ~1e-6 error

    # labels branch: masked-LM cross-entropy loss (ignore_index = -100)
    labels = jnp.where(jnp.arange(S)[None, :] % 3 == 0, input_ids, -100).astype(jnp.int32)
    loss = bert_mlm_forward(params, cfg, input_ids, attention_mask, labels=labels)
    loss = jax.block_until_ready(loss)
    assert loss.shape == ()
    assert bool(jnp.isfinite(loss))

    print("KERNEL_OK")
</pallas_src>

<mosaic_0001>
module attributes {stable_mosaic.version = 11 : i64} {
  func.func @_layernorm_kernel(%arg0: i32, %arg1: memref<16x32xf32, #tpu.memory_space<vmem>>, %arg2: memref<1x32xf32, #tpu.memory_space<vmem>>, %arg3: memref<1x32xf32, #tpu.memory_space<vmem>>, %arg4: memref<16x32xbf16, #tpu.memory_space<vmem>>) attributes {dimension_semantics = [#tpu.dimension_semantics<parallel>], iteration_bounds = array<i64: 1>, scalar_prefetch = 0 : i64, scratch_operands = 0 : i64, tpu.core_type = #tpu.core_type<tc>, window_params = [{transform_indices = @transform_0, window_bounds = array<i64: 16, 32>}, {pipeline_mode = #tpu.pipeline_mode<synchronous>, transform_indices = @transform_1, window_bounds = array<i64: 1, 32>}, {pipeline_mode = #tpu.pipeline_mode<synchronous>, transform_indices = @transform_2, window_bounds = array<i64: 1, 32>}, {transform_indices = @transform_3, window_bounds = array<i64: 16, 32>}]} {
    %c0 = arith.constant 0 : index
    %c0_0 = arith.constant 0 : index
    %0 = vector.load %arg1[%c0, %c0_0] : memref<16x32xf32, #tpu.memory_space<vmem>>, vector<16x32xf32>
    %cst = arith.constant dense<0.000000e+00> : vector<16xf32>
    %1 = vector.multi_reduction <add>, %0, %cst [1] : vector<16x32xf32> to vector<16xf32>
    %2 = vector.shape_cast %1 : vector<16xf32> to vector<16x1xf32>
    %cst_1 = arith.constant 3.200000e+01 : f32
    %3 = vector.broadcast %cst_1 : f32 to vector<16x1xf32>
    %4 = arith.divf %2, %3 : vector<16x1xf32>
    %5 = vector.broadcast %4 : vector<16x1xf32> to vector<16x32xf32>
    %6 = arith.subf %0, %5 : vector<16x32xf32>
    %7 = arith.mulf %6, %6 : vector<16x32xf32>
    %cst_2 = arith.constant dense<0.000000e+00> : vector<16xf32>
    %8 = vector.multi_reduction <add>, %7, %cst_2 [1] : vector<16x32xf32> to vector<16xf32>
    %9 = vector.shape_cast %8 : vector<16xf32> to vector<16x1xf32>
    %cst_3 = arith.constant 3.200000e+01 : f32
    %10 = vector.broadcast %cst_3 : f32 to vector<16x1xf32>
    %11 = arith.divf %9, %10 : vector<16x1xf32>
    %12 = vector.broadcast %4 : vector<16x1xf32> to vector<16x32xf32>
    %13 = arith.subf %0, %12 : vector<16x32xf32>
    %cst_4 = arith.constant 9.99999996E-13 : f32
    %14 = vector.broadcast %cst_4 : f32 to vector<16x1xf32>
    %15 = arith.addf %11, %14 : vector<16x1xf32>
    %16 = math.rsqrt %15 : vector<16x1xf32>
    %17 = vector.broadcast %16 : vector<16x1xf32> to vector<16x32xf32>
    %18 = arith.mulf %13, %17 : vector<16x32xf32>
    %c0_5 = arith.constant 0 : index
    %c0_6 = arith.constant 0 : index
    %19 = vector.load %arg2[%c0_5, %c0_6] : memref<1x32xf32, #tpu.memory_space<vmem>>, vector<1x32xf32>
    %20 = vector.broadcast %19 : vector<1x32xf32> to vector<16x32xf32>
    %21 = arith.mulf %18, %20 : vector<16x32xf32>
    %c0_7 = arith.constant 0 : index
    %c0_8 = arith.constant 0 : index
    %22 = vector.load %arg3[%c0_7, %c0_8] : memref<1x32xf32, #tpu.memory_space<vmem>>, vector<1x32xf32>
    %23 = vector.broadcast %22 : vector<1x32xf32> to vector<16x32xf32>
    %24 = arith.addf %21, %23 : vector<16x32xf32>
    %25 = arith.truncf %24 : vector<16x32xf32> to vector<16x32xbf16>
    %c0_9 = arith.constant 0 : index
    %c0_10 = arith.constant 0 : index
    %26 = vector.load %arg4[%c0_9, %c0_10] : memref<16x32xbf16, #tpu.memory_space<vmem>>, vector<16x32xbf16>
    tpu.vector_store %arg4[%c0_9, %c0_10], %25 {strides = array<i32>} : memref<16x32xbf16, #tpu.memory_space<vmem>>, vector<16x32xbf16>,
    return
  }
  func.func @transform_0(%arg0: i32) -> (i32, i32) {
    %c0_i32 = arith.constant 0 : i32
    %c0_i32_0 = arith.constant 0 : i32
    return %arg0, %c0_i32 : i32, i32
  }
  func.func @transform_1(%arg0: i32) -> (i32, i32) {
    %c0_i32 = arith.constant 0 : i32
    %c0_i32_0 = arith.constant 0 : i32
    %c0_i32_1 = arith.constant 0 : i32
    return %c0_i32, %c0_i32_0 : i32, i32
  }
  func.func @transform_2(%arg0: i32) -> (i32, i32) {
    %c0_i32 = arith.constant 0 : i32
    %c0_i32_0 = arith.constant 0 : i32
    %c0_i32_1 = arith.constant 0 : i32
    return %c0_i32, %c0_i32_0 : i32, i32
  }
  func.func @transform_3(%arg0: i32) -> (i32, i32) {
    %c0_i32 = arith.constant 0 : i32
    %c0_i32_0 = arith.constant 0 : i32
    return %arg0, %c0_i32 : i32, i32
  }
}

</mosaic_0001>

<llo_original>
// kernel: tpu_custom_call.1
$region0: #{tpu_custom_call.1}
  #allocation0 [shape = 'u32[]', space=smem, size = 0x4, offset = 0x4, fixed_abs, tag = 'smem constant byte address 0x4 - core index']
  #allocation1 [shape = 'u32[144,128]{1,0:T(1,128)}', space=vmem, size = 0x12000, scoped, tag = 'internal scratch']
  %s0 = inlined_call_operand.hbm [shape: f32[16,32], index: 0, kind: input, shape index: {}]
  %s1 = inlined_call_operand.vmem [shape: f32[1,32], index: 1, kind: input, shape index: {}]
  %s2 = inlined_call_operand.vmem [shape: f32[1,32], index: 2, kind: input, shape index: {}]
  %s3 = inlined_call_operand.hbm [shape: bf16[16,32], index: 3, kind: output, shape index: {}]
  %s4 = sld [smem:[#allocation0]]
  $region26: #{tpu_custom_call.1} parent=0
    _
  %s6 = ssub.s32 1, %s4
  %s7 = scalar_select 0, %s6, %s4
  $region1: #{tpu_custom_call.1} parent=0
    #allocation2 [shape = 'u8[8192]{0}', space=vmem, size = 0x2000, scoped, tag = 'input window, operand 0, single buffered']
    #allocation3 [shape = 's32[1]{0}', space=sflag, size = 0x4, scoped, tag = 'scoped memory for tpu_custom_call.1']
    #allocation4 [shape = 's32[1]{0}', space=sflag, size = 0x4, scoped, tag = 'scoped memory for tpu_custom_call.1']
    #allocation5 [shape = 'u8[4096]{0}', space=vmem, size = 0x1000, scoped, tag = 'output window, operand 0, single buffered']
    %8 = vsyncpa [#allocation3], 0
    %9 = vsyncpa [#allocation4], 0
    // Predicated region
    $region2: #{tpu_custom_call.1} parent=1 // pred_check
      _
    $region3: #{tpu_custom_call.1} parent=1 // pred_check_branch
      %11 = sbr.rel (0) target = $region5
    $region4: #{tpu_custom_call.1} parent=1 // pred_region
      %s13 = ssub.s32 256, 256
      %14 = vsyncadd [#allocation3], %s13
      %s15 = sshll.u32 [#allocation2], 4
      %s16 = int_to_ptr.vmem [resolvable:$true] %s15
      %21 = dma.hbm_to_vmem [thread:$0]  %s0, 256, %s16, [#allocation3], 128, 128, 8
    $region5: #{tpu_custom_call.1} parent=1 // pred_fallthru
      _
    // Predicated region
    $region6: #{tpu_custom_call.1} parent=1 // pred_check
      _
    $region7: #{tpu_custom_call.1} parent=1 // pred_check_branch
      %23 = sbr.rel (0) target = $region9
    $region8: #{tpu_custom_call.1} parent=1 // pred_region
      _
    $region9: #{tpu_custom_call.1} parent=1 // pred_fallthru
      _
    // Predicated region
    $region10: #{tpu_custom_call.1} parent=1 // pred_check
      _
    $region11: #{tpu_custom_call.1} parent=1 // pred_check_branch
      %25 = sbr.rel (0) target = $region13
    $region12: #{tpu_custom_call.1} parent=1 // pred_region
      _
    $region13: #{tpu_custom_call.1} parent=1 // pred_fallthru
      _
    // Predicated region
    $region14: #{tpu_custom_call.1} parent=1 // pred_check
      _
    $region15: #{tpu_custom_call.1} parent=1 // pred_check_branch
      %27 = sbr.rel (0) target = $region17
    $region16: #{tpu_custom_call.1} parent=1 // pred_region
      %28 = dma.done [#allocation3], 256
    $region17: #{tpu_custom_call.1} parent=1 // pred_fallthru
      _
    %v29 = vld [vmem:[#allocation2] sm:$0xff]
    %v30 = vld [vmem:[#allocation2 + $0x8] sm:$0xff]
    %vm31 = vcmask 261120
    %v32 = vsel %vm31, %v29, 0.0
    %33 = vadd.xlane.f32.xlu0 %v32
    %v34 = vpop.xlane.xlu0 %33
    %v35 = vsel %vm31, %v30, 0.0
    %36 = vadd.xlane.f32.xlu0 %v35
    %v37 = vpop.xlane.xlu0 %36
    %v38 = vrcp.pop 32.0
    %v39 = vmul.f32 %v34, %v38
    %v40 = vmul.f32 %v37, %v38
    %v41 = vsub.f32 %v29, %v39
    %v42 = vsub.f32 %v30, %v40
    %v43 = vmul.f32 %v41, %v41
    %v44 = vmul.f32 %v42, %v42
    %v45 = vsel %vm31, %v43, 0.0
    %46 = vadd.xlane.f32.xlu0 %v45
    %v47 = vpop.xlane.xlu0 %46
    %v48 = vsel %vm31, %v44, 0.0
    %49 = vadd.xlane.f32.xlu0 %v48
    %v50 = vpop.xlane.xlu0 %49
    %v51 = vmul.f32 %v47, %v38
    %v52 = vmul.f32 %v50, %v38
    %v53 = vadd.f32 %v51, 1e-12
    %v54 = vadd.f32 %v52, 1e-12
    %v55 = vrsqrt.pop %v53
    %v56 = vrsqrt.pop %v54
    %v57 = vmul.f32 %v41, %v55
    %v58 = vmul.f32 %v42, %v56
    %v59 = vld [vmem:[%s1] sm:$0x1]
    %v61 = vlaneseq
    %v62 = vshrl.u32 %v61, 7
    %v63 = vsub.s32 0, %v62
    %v64 = vrot.slane %v59, %v63
    %v66 = vmul.f32 %v57, %v64
    %v67 = vmul.f32 %v58, %v64
    %v68 = vld [vmem:[%s2] sm:$0x1]
    %v70 = vlaneseq
    %v71 = vshrl.u32 %v70, 7
    %v72 = vsub.s32 0, %v71
    %v73 = vrot.slane %v68, %v72
    %v75 = vadd.f32 %v66, %v73
    %v76 = vadd.f32 %v67, %v73
    %v77 = vpack.c.bf16 %v76, %v75
    %v79 = vunpack.c.l.b16 %v77
    %v80 = vunpack.c.h.b16 %v77
    %v81 = vpack.c.b16 %v79, %v79
    %v82 = vpack.c.b16 %v80, %v80
    %vm85 = vcmask 257024
    %86 = vst.msk [vmem:[#allocation5] sm:$0xf] %vm85, %v81
    %87 = vst.msk [vmem:[#allocation5 + $0x4] sm:$0xf] %vm85, %v82
    // Predicated region
    $region18: #{tpu_custom_call.1} parent=1 // pred_check
      _
    $region19: #{tpu_custom_call.1} parent=1 // pred_check_branch
      %89 = sbr.rel (0) target = $region21
    $region20: #{tpu_custom_call.1} parent=1 // pred_region
      %s91 = ssub.s32 128, 128
      %92 = vsyncadd [#allocation4], %s91
      %s93 = sshll.u32 [#allocation5], 4
      %s94 = int_to_ptr.vmem [resolvable:$true] %s93
      %99 = dma.vmem_to_hbm [thread:$0]  %s94, 128, %s3, [#allocation4], 64, 64, 4
    $region21: #{tpu_custom_call.1} parent=1 // pred_fallthru
      _
    // Predicated region
    $region22: #{tpu_custom_call.1} parent=1 // pred_check
      _
    $region23: #{tpu_custom_call.1} parent=1 // pred_check_branch
      %101 = sbr.rel (0) target = $region25
    $region24: #{tpu_custom_call.1} parent=1 // pred_region
      %102 = dma.done [#allocation4], 128
    $region25: #{tpu_custom_call.1} parent=1 // pred_fallthru
      _
    %103 = vsyncpa [#allocation3], 1
    %104 = vsyncpa [#allocation4], 1

</llo_original>
